<compile_context>
chip_gen: v6e
topology: v6e:2x2x1
jax: 0.10.0
libtpu: 0.0.40
codegen_flags: <defaults>
</compile_context>

<pallas_src>
import functools

import jax
import jax.numpy as jnp
from jax.experimental import pallas as pl
from jax.experimental.pallas import tpu as pltpu


_LANES = 128
_SUBLANES = 8
_TILE_ROWS_MAX = 1024  # (1024,128) f32 = 512 KiB per input buffer


def _focal_loss_kernel(x_ref, t_ref, out_ref, acc_ref, *,
                       alpha, gamma, total, tile_rows, steps, needs_mask):
    k = pl.program_id(1)

    x = x_ref[...].astype(jnp.float32)
    t = t_ref[...].astype(jnp.float32)

    probs = jax.nn.sigmoid(x)
    pt = probs * t + (1.0 - probs) * (1.0 - t)
    one_minus_pt = 1.0 - pt

    # Integer gamma -> repeated multiply (VPU) instead of float pow, which
    # lowers to exp(gamma*log(x)) and eats the single EUP slot.
    if gamma == float(int(gamma)) and 0 <= int(gamma) <= 8:
        g = int(gamma)
        if g == 0:
            mod = jnp.ones_like(one_minus_pt)
        else:
            mod = one_minus_pt
            for _ in range(g - 1):
                mod = mod * one_minus_pt
    else:
        mod = one_minus_pt ** gamma

    focal = (-alpha) * mod * jnp.log(pt + 1e-05)

    if needs_mask:
        # Zero out padded tail elements (padding was added in the wrapper).
        row_start = (pl.program_id(0) * steps + k) * tile_rows
        row_idx = jax.lax.broadcasted_iota(jnp.int32, (tile_rows, _LANES), 0)
        lane_idx = jax.lax.broadcasted_iota(jnp.int32, (tile_rows, _LANES), 1)
        flat_idx = (row_start + row_idx) * _LANES + lane_idx
        focal = jnp.where(flat_idx < total, focal, 0.0)

    # Fold the (tile_rows,128) block into an (8,128) vreg-shaped partial sum:
    # pure vreg-to-vreg VPU adds, no cross-lane XLU work inside the kernel.
    partial = jnp.sum(
        focal.reshape(tile_rows // _SUBLANES, _SUBLANES, _LANES), axis=0)

    if steps == 1:
        # Single reduction step: no accumulator phases needed.
        out_ref[...] = partial
    else:
        @pl.when(k == 0)
        def _():
            acc_ref[...] = jnp.zeros_like(acc_ref)

        acc_ref[...] += partial

        @pl.when(k == steps - 1)
        def _():
            out_ref[...] = acc_ref[...]


def focal_loss_pallas(logits, targets, alpha=0.25, gamma=2.0):
    """Matches FocalLoss.forward: mean over all elements, returns scalar f32."""
    assert logits.shape == targets.shape
    total = logits.size

    rows = -(-total // _LANES)

    def _round_up(v, m):
        return -(-v // m) * m

    if rows <= _TILE_ROWS_MAX:
        # Small: the whole problem is one block, grid (1,1).
        num_parts, steps = 1, 1
        tile_rows = _round_up(rows, _SUBLANES)
    elif rows <= 4 * _TILE_ROWS_MAX:
        num_parts = 1
        tile_rows = _TILE_ROWS_MAX
        steps = -(-rows // tile_rows)
    else:
        # Large: split the row range over a leading "parallel" axis so both
        # v7x TensorCores work; inner axis is the sequential reduction.
        num_parts = 2
        tile_rows = _TILE_ROWS_MAX
        steps = -(-rows // (tile_rows * num_parts))

    rows_padded = tile_rows * steps * num_parts
    padded_total = rows_padded * _LANES
    needs_mask = padded_total != total

    def _prep(a):
        flat = a.reshape(-1)
        if padded_total != total:
            flat = jnp.pad(flat, (0, padded_total - total))
        return flat.reshape(rows_padded, _LANES)

    x2 = _prep(logits)
    t2 = _prep(targets)

    kernel = functools.partial(
        _focal_loss_kernel,
        alpha=float(alpha),
        gamma=float(gamma),
        total=total,
        tile_rows=tile_rows,
        steps=steps,
        needs_mask=needs_mask,
    )

    partials = pl.pallas_call(
        kernel,
        out_shape=jax.ShapeDtypeStruct((num_parts, _SUBLANES, _LANES),
                                       jnp.float32),
        grid_spec=pltpu.PrefetchScalarGridSpec(
            num_scalar_prefetch=0,
            grid=(num_parts, steps),
            in_specs=[
                pl.BlockSpec((tile_rows, _LANES),
                             lambda p, k: (p * steps + k, 0)),
                pl.BlockSpec((tile_rows, _LANES),
                             lambda p, k: (p * steps + k, 0)),
            ],
            out_specs=pl.BlockSpec((None, _SUBLANES, _LANES),
                                   lambda p, k: (p, 0, 0)),
            scratch_shapes=[pltpu.VMEM((_SUBLANES, _LANES), jnp.float32)],
        ),
        compiler_params=pltpu.CompilerParams(
            dimension_semantics=("parallel", "arbitrary"),
        ),
    )(x2, t2)

    # Single cross-lane reduction, done once by XLA (pairwise -> accurate).
    return jnp.sum(partials) / total


def focal_loss_ref(logits, targets, alpha=0.25, gamma=2.0):
    probs = jax.nn.sigmoid(logits.astype(jnp.float32))
    t = targets.astype(jnp.float32)
    pt = probs * t + (1.0 - probs) * (1.0 - t)
    fl = -alpha * (1.0 - pt) ** gamma * jnp.log(pt + 1e-05)
    return jnp.mean(fl)


if __name__ == "__main__":
    key = jax.random.PRNGKey(0)
    k1, k2, k3, k4 = jax.random.split(key, 4)

    # NCHW logits/targets, small shapes: batch=2, channels=4, spatial=16x16
    logits = jax.random.normal(k1, (2, 4, 16, 16), dtype=jnp.float32)
    targets = (jax.random.uniform(k2, (2, 4, 16, 16)) > 0.5).astype(jnp.float32)

    loss = focal_loss_pallas(logits, targets, alpha=0.25, gamma=2.0)
    loss = jax.block_until_ready(loss)
    ref = focal_loss_ref(logits, targets, alpha=0.25, gamma=2.0)
    assert jnp.allclose(loss, ref, atol=1e-5, rtol=1e-5), (loss, ref)

    # Ragged shape (exercises the zero-pad + mask path).
    logits_r = jax.random.normal(k3, (2, 3, 7, 5), dtype=jnp.float32)
    targets_r = (jax.random.uniform(k4, (2, 3, 7, 5)) > 0.5).astype(jnp.float32)
    loss_r = focal_loss_pallas(logits_r, targets_r, alpha=0.25, gamma=2.0)
    loss_r = jax.block_until_ready(loss_r)
    ref_r = focal_loss_ref(logits_r, targets_r, alpha=0.25, gamma=2.0)
    assert jnp.allclose(loss_r, ref_r, atol=1e-5, rtol=1e-5), (loss_r, ref_r)

    print("KERNEL_OK")
</pallas_src>

<mosaic_0001>
module attributes {stable_mosaic.version = 11 : i64} {
  func.func @_focal_loss_kernel(%arg0: i32, %arg1: i32, %arg2: memref<16x128xf32, #tpu.memory_space<vmem>>, %arg3: memref<16x128xf32, #tpu.memory_space<vmem>>, %arg4: memref<1x8x128xf32, #tpu.memory_space<vmem>>, %arg5: memref<8x128xf32, #tpu.memory_space<vmem>>) attributes {dimension_semantics = [#tpu.dimension_semantics<parallel>, #tpu.dimension_semantics<arbitrary>], iteration_bounds = array<i64: 1, 1>, scalar_prefetch = 0 : i64, scratch_operands = 1 : i64, tpu.core_type = #tpu.core_type<tc>, window_params = [{transform_indices = @transform_0, window_bounds = array<i64: 16, 128>}, {transform_indices = @transform_1, window_bounds = array<i64: 16, 128>}, {transform_indices = @transform_2, window_bounds = array<i64: 1, 8, 128>}]} {
    %c0 = arith.constant 0 : index
    %c0_0 = arith.constant 0 : index
    %0 = vector.load %arg2[%c0, %c0_0] : memref<16x128xf32, #tpu.memory_space<vmem>>, vector<16x128xf32>
    %c0_1 = arith.constant 0 : index
    %c0_2 = arith.constant 0 : index
    %1 = vector.load %arg3[%c0_1, %c0_2] : memref<16x128xf32, #tpu.memory_space<vmem>>, vector<16x128xf32>
    %2 = arith.negf %0 : vector<16x128xf32>
    %3 = math.exp %2 : vector<16x128xf32>
    %cst = arith.constant 1.000000e+00 : f32
    %4 = vector.broadcast %cst : f32 to vector<16x128xf32>
    %5 = arith.addf %4, %3 : vector<16x128xf32>
    %6 = arith.divf %4, %5 : vector<16x128xf32>
    %7 = arith.mulf %6, %1 : vector<16x128xf32>
    %cst_3 = arith.constant 1.000000e+00 : f32
    %8 = vector.broadcast %cst_3 : f32 to vector<16x128xf32>
    %9 = arith.subf %8, %6 : vector<16x128xf32>
    %cst_4 = arith.constant 1.000000e+00 : f32
    %10 = vector.broadcast %cst_4 : f32 to vector<16x128xf32>
    %11 = arith.subf %10, %1 : vector<16x128xf32>
    %12 = arith.mulf %9, %11 : vector<16x128xf32>
    %13 = arith.addf %7, %12 : vector<16x128xf32>
    %cst_5 = arith.constant 1.000000e+00 : f32
    %14 = vector.broadcast %cst_5 : f32 to vector<16x128xf32>
    %15 = arith.subf %14, %13 : vector<16x128xf32>
    %16 = arith.mulf %15, %15 : vector<16x128xf32>
    %cst_6 = arith.constant -2.500000e-01 : f32
    %17 = vector.broadcast %cst_6 : f32 to vector<16x128xf32>
    %18 = arith.mulf %17, %16 : vector<16x128xf32>
    %cst_7 = arith.constant 9.99999974E-6 : f32
    %19 = vector.broadcast %cst_7 : f32 to vector<16x128xf32>
    %20 = arith.addf %13, %19 : vector<16x128xf32>
    %21 = math.log %20 : vector<16x128xf32>
    %22 = arith.mulf %18, %21 : vector<16x128xf32>
    %23 = vector.shape_cast %22 : vector<16x128xf32> to vector<2x8x128xf32>
    %cst_8 = arith.constant dense<0.000000e+00> : vector<8x128xf32>
    %24 = vector.multi_reduction <add>, %23, %cst_8 [0] : vector<2x8x128xf32> to vector<8x128xf32>
    %c0_9 = arith.constant 0 : index
    %c0_10 = arith.constant 0 : index
    %c0_11 = arith.constant 0 : index
    %25 = vector.load %arg4[%c0_9, %c0_10, %c0_11] : memref<1x8x128xf32, #tpu.memory_space<vmem>>, vector<1x8x128xf32>
    %26 = vector.shape_cast %25 : vector<1x8x128xf32> to vector<8x128xf32>
    %27 = vector.shape_cast %24 : vector<8x128xf32> to vector<1x8x128xf32>
    tpu.vector_store %arg4[%c0_9, %c0_10, %c0_11], %27 {strides = array<i32>} : memref<1x8x128xf32, #tpu.memory_space<vmem>>, vector<1x8x128xf32>,
    return
  }
  func.func @transform_0(%arg0: i32, %arg1: i32) -> (i32, i32) {
    %c1_i32 = arith.constant 1 : i32
    %0 = arith.muli %arg0, %c1_i32 : i32
    %1 = arith.addi %0, %arg1 : i32
    %c0_i32 = arith.constant 0 : i32
    %c0_i32_0 = arith.constant 0 : i32
    return %1, %c0_i32 : i32, i32
  }
  func.func @transform_1(%arg0: i32, %arg1: i32) -> (i32, i32) {
    %c1_i32 = arith.constant 1 : i32
    %0 = arith.muli %arg0, %c1_i32 : i32
    %1 = arith.addi %0, %arg1 : i32
    %c0_i32 = arith.constant 0 : i32
    %c0_i32_0 = arith.constant 0 : i32
    return %1, %c0_i32 : i32, i32
  }
  func.func @transform_2(%arg0: i32, %arg1: i32) -> (i32, i32, i32) {
    %c0_i32 = arith.constant 0 : i32
    %c0_i32_0 = arith.constant 0 : i32
    %c0_i32_1 = arith.constant 0 : i32
    return %arg0, %c0_i32, %c0_i32_0 : i32, i32, i32
  }
}

</mosaic_0001>

<llo_original>
// kernel: tpu_custom_call.1
$region0: #{tpu_custom_call.1}
  #allocation0 [shape = 'u32[]', space=smem, size = 0x4, offset = 0x4, fixed_abs, tag = 'smem constant byte address 0x4 - core index']
  #allocation1 [shape = 'u32[144,128]{1,0:T(1,128)}', space=vmem, size = 0x12000, scoped, tag = 'internal scratch']
  #allocation2 [shape = 'f32[8,128]{1,0:T(8,128)}', space=vmem, size = 0x1000, scoped, tag = 'scratch operand']
  %s0 = inlined_call_operand.hbm [shape: f32[16,128], index: 0, kind: input, shape index: {}]
  %s1 = inlined_call_operand.hbm [shape: f32[16,128], index: 1, kind: input, shape index: {}]
  %s2 = inlined_call_operand.hbm [shape: f32[1,8,128], index: 2, kind: output, shape index: {}]
  %s3 = sld [smem:[#allocation0]]
  $region26: #{tpu_custom_call.1} parent=0
    _
  %s5 = ssub.s32 1, %s3
  %s6 = scalar_select 0, %s5, %s3
  $region1: #{tpu_custom_call.1} parent=0
    #allocation3 [shape = 'u8[8192]{0}', space=vmem, size = 0x2000, scoped, tag = 'input window, operand 0, single buffered']
    #allocation4 [shape = 's32[1]{0}', space=sflag, size = 0x4, scoped, tag = 'scoped memory for tpu_custom_call.1']
    #allocation5 [shape = 's32[1]{0}', space=sflag, size = 0x4, scoped, tag = 'scoped memory for tpu_custom_call.1']
    #allocation6 [shape = 'u8[8192]{0}', space=vmem, size = 0x2000, scoped, tag = 'input window, operand 1, single buffered']
    #allocation7 [shape = 's32[1]{0}', space=sflag, size = 0x4, scoped, tag = 'scoped memory for tpu_custom_call.1']
    #allocation8 [shape = 'u8[4096]{0}', space=vmem, size = 0x1000, scoped, tag = 'output window, operand 0, single buffered']
    %7 = vsyncpa [#allocation4], 0
    %8 = vsyncpa [#allocation7], 0
    %9 = vsyncpa [#allocation5], 0
    // Predicated region
    $region2: #{tpu_custom_call.1} parent=1 // pred_check
      _
    $region3: #{tpu_custom_call.1} parent=1 // pred_check_branch
      %11 = sbr.rel (0) target = $region5
    $region4: #{tpu_custom_call.1} parent=1 // pred_region
      %s12 = sadd.s32 0, 0
      %s13 = smul.u32 2, %s12
      %s15 = ssub.s32 256, 256
      %16 = vsyncadd [#allocation4], %s15
      %s17 = smul.addr %s13, 128
      %s18 = scalar_lea.hbm %s0, %s17
      %s19 = sshll.u32 [#allocation3], 4
      %s20 = int_to_ptr.vmem [resolvable:$true] %s19
      %25 = dma.hbm_to_vmem [thread:$0]  %s18, 256, %s20, [#allocation4], 128, 128, 8
    $region5: #{tpu_custom_call.1} parent=1 // pred_fallthru
      _
    // Predicated region
    $region6: #{tpu_custom_call.1} parent=1 // pred_check
      _
    $region7: #{tpu_custom_call.1} parent=1 // pred_check_branch
      %27 = sbr.rel (0) target = $region9
    $region8: #{tpu_custom_call.1} parent=1 // pred_region
      %s28 = sadd.s32 0, 0
      %s29 = smul.u32 2, %s28
      %s31 = ssub.s32 256, 256
      %32 = vsyncadd [#allocation7], %s31
      %s33 = smul.addr %s29, 128
      %s34 = scalar_lea.hbm %s1, %s33
      %s35 = sshll.u32 [#allocation6], 4
      %s36 = int_to_ptr.vmem [resolvable:$true] %s35
      %41 = dma.hbm_to_vmem [thread:$0]  %s34, 256, %s36, [#allocation7], 128, 128, 8
    $region9: #{tpu_custom_call.1} parent=1 // pred_fallthru
      _
    // Predicated region
    $region10: #{tpu_custom_call.1} parent=1 // pred_check
      _
    $region11: #{tpu_custom_call.1} parent=1 // pred_check_branch
      %43 = sbr.rel (0) target = $region13
    $region12: #{tpu_custom_call.1} parent=1 // pred_region
      %44 = dma.done [#allocation4], 256
    $region13: #{tpu_custom_call.1} parent=1 // pred_fallthru
      _
    // Predicated region
    $region14: #{tpu_custom_call.1} parent=1 // pred_check
      _
    $region15: #{tpu_custom_call.1} parent=1 // pred_check_branch
      %46 = sbr.rel (0) target = $region17
    $region16: #{tpu_custom_call.1} parent=1 // pred_region
      %47 = dma.done [#allocation7], 256
    $region17: #{tpu_custom_call.1} parent=1 // pred_fallthru
      _
    %s48 = sadd.s32 0, 0
    %s49 = smul.u32 2, %s48
    %s50 = sadd.s32 0, 0
    %s51 = smul.u32 2, %s50
    %v52 = vld [vmem:[#allocation3] sm:$0xff]
    %v53 = vld [vmem:[#allocation3 + $0x8] sm:$0xff]
    %v54 = vld [vmem:[#allocation6] sm:$0xff]
    %v55 = vld [vmem:[#allocation6 + $0x8] sm:$0xff]
    %v56 = vxor.u32 %v52, 2147483648
    %v57 = vxor.u32 %v53, 2147483648
    %v58 = vmul.f32 %v56, 1.442695
    %v59 = vpow.pop %v58
    %v60 = vmul.f32 %v57, 1.442695
    %v61 = vpow.pop %v60
    %v62 = vadd.f32 %v59, 1.0
    %v63 = vadd.f32 %v61, 1.0
    %v64 = vrcp.pop %v62
    %v65 = vmul.f32 1.0, %v64
    %v66 = vrcp.pop %v63
    %v67 = vmul.f32 1.0, %v66
    %v68 = vmul.f32 %v65, %v54
    %v69 = vmul.f32 %v67, %v55
    %v70 = vsub.f32 1.0, %v65
    %v71 = vsub.f32 1.0, %v67
    %v72 = vsub.f32 1.0, %v54
    %v73 = vsub.f32 1.0, %v55
    %v74 = vmul.f32 %v70, %v72
    %v75 = vmul.f32 %v71, %v73
    %v76 = vadd.f32 %v68, %v74
    %v77 = vadd.f32 %v69, %v75
    %v78 = vsub.f32 1.0, %v76
    %v79 = vsub.f32 1.0, %v77
    %v80 = vmul.f32 %v78, %v78
    %v81 = vmul.f32 %v79, %v79
    %v82 = vmul.f32 %v80, -0.25
    %v83 = vmul.f32 %v81, -0.25
    %v84 = vadd.f32 %v76, 1e-05
    %v85 = vadd.f32 %v77, 1e-05
    %v86 = vlog2.pop %v84
    %v87 = vmul.f32 %v86, 0.6931472
    %v88 = vlog2.pop %v85
    %v89 = vmul.f32 %v88, 0.6931472
    %v90 = vmul.f32 %v82, %v87
    %v91 = vmul.f32 %v83, %v89
    %v92 = vadd.f32 %v90, %v91
    %93 = vst [vmem:[#allocation8] sm:$0xff] %v92
    // Predicated region
    $region18: #{tpu_custom_call.1} parent=1 // pred_check
      _
    $region19: #{tpu_custom_call.1} parent=1 // pred_check_branch
      %95 = sbr.rel (0) target = $region21
    $region20: #{tpu_custom_call.1} parent=1 // pred_region
      %s97 = ssub.s32 128, 128
      %98 = vsyncadd [#allocation5], %s97
      %s100 = sshll.u32 [#allocation8], 4
      %s101 = int_to_ptr.vmem [resolvable:$true] %s100
      %103 = dma.vmem_to_hbm [thread:$0]  %s101, 128, %s2, [#allocation5]
    $region21: #{tpu_custom_call.1} parent=1 // pred_fallthru
      _
    // Predicated region
    $region22: #{tpu_custom_call.1} parent=1 // pred_check
      _
    $region23: #{tpu_custom_call.1} parent=1 // pred_check_branch
      %105 = sbr.rel (0) target = $region25
    $region24: #{tpu_custom_call.1} parent=1 // pred_region
      %106 = dma.done [#allocation5], 128
    $region25: #{tpu_custom_call.1} parent=1 // pred_fallthru
      _
    %107 = vsyncpa [#allocation4], 1
    %108 = vsyncpa [#allocation7], 1
    %109 = vsyncpa [#allocation5], 1

</llo_original>
